<compile_context>
chip_gen: v7x
topology: tpu7x:2x2x1
jax: 0.10.0
libtpu: 0.0.40
codegen_flags: <defaults>
</compile_context>

<pallas_src>
import jax
import jax.numpy as jnp
from jax.experimental import pallas as pl
from jax.experimental.pallas import tpu as pltpu


def _attn_kernel(q_ref, k_ref,
                 wq_a_ref, wk_a_ref, b_a_ref,
                 wq_aug_ref, m_aug_ref, b_aug_ref,
                 fused_ref):
    """One batch tile of additive attention.

    q_ref      [TB, Dq]     f32   -- Q[0] tile (cast to bf16 in-kernel)
    k_ref      [TB, Dk]     f32   -- K[0] tile
    wq_a_ref   [Dq, S]      bf16  -- attn.weight^T, query rows (pre-split)
    wk_a_ref   [Dk, S]      bf16  -- attn.weight^T, key rows
    b_a_ref    [1, S]       f32
    wq_aug_ref [Dq, O+S]    bf16  -- [Wq_comb^T | 0]
    m_aug_ref  [S,  O+S]    bf16  -- [V[0] @ Wc_comb^T | I_S]  (V folded in)
    b_aug_ref  [1, O+S]     f32   -- [b_comb | 0]
    fused_ref  [TB, O+S]    f32   -- [output | attn_weights]  (single store)
    """
    mm = wq_a_ref.dtype
    q = q_ref[...].astype(mm)                          # in-kernel bf16 cast (VPU)
    k = k_ref[...].astype(mm)

    # logits = cat([q, k]) @ W_attn^T + b   (two MXU dots, f32 accumulation)
    logits = (jnp.dot(q, wq_a_ref[...], preferred_element_type=jnp.float32)
              + jnp.dot(k, wk_a_ref[...], preferred_element_type=jnp.float32)
              + b_a_ref[...])

    # numerically stable softmax over seq_len (all f32 VPU/XLU/EUP math)
    mx = jnp.max(logits, axis=-1, keepdims=True)
    e = jnp.exp(logits - mx)
    w = e * pl.reciprocal(jnp.sum(e, axis=-1, keepdims=True), approx=True)

    # fused = q @ [Wq_comb | 0] + w @ [V@Wc_comb | I_S] + [b_comb | 0]
    #       = [ combine(cat([q, w@V])) | w ]        -- one lane-fused store
    fused = (jnp.dot(q, wq_aug_ref[...], preferred_element_type=jnp.float32)
             + jnp.dot(w.astype(mm), m_aug_ref[...],
                       preferred_element_type=jnp.float32)
             + b_aug_ref[...])
    fused_ref[...] = fused.astype(fused_ref.dtype)


def _round_up(x, m):
    return (x + m - 1) // m * m


_TB_MAX = 4096  # per-row live set ~300 B -> VMEM is a non-issue even double-buffered


def _pick_batch_tile(batch):
    b16 = _round_up(batch, 16)
    if b16 <= 256:
        return b16                      # tiny batch: one padded tile
    # Large batch: tiles as big as possible (per-grid-step overhead ~0.35us;
    # mem-bound roofline wants 1024+ row tiles) but with >=2 grid steps so the
    # ("parallel",) axis shards across v7x's two TensorCores.
    n_steps = max(2, pl.cdiv(b16, _TB_MAX))
    return _round_up(pl.cdiv(b16, n_steps), 16)


def prepare_params(params, query_size, matmul_dtype=jnp.bfloat16):
    """One-time weight prep (transpose / split / augment / cast), hoisted out of
    the per-call forward path. nn.Linear stores weight as [out, in]."""
    w_attn_t = jnp.asarray(params["w_attn"], jnp.float32).T     # [Dq+Dk, S]
    w_comb_t = jnp.asarray(params["w_comb"], jnp.float32).T     # [Dq+H, O]
    seq_len = w_attn_t.shape[1]
    out_size = w_comb_t.shape[1]
    wq_comb = w_comb_t[:query_size]                             # [Dq, O]
    # Augmented combine weight/bias for the lane-fused [output | attn_w] store.
    wq_aug = jnp.concatenate(
        [wq_comb, jnp.zeros((query_size, seq_len), jnp.float32)], axis=1)
    b_aug = jnp.concatenate(
        [jnp.asarray(params["b_comb"], jnp.float32),
         jnp.zeros((seq_len,), jnp.float32)]).reshape(1, out_size + seq_len)
    return {
        "wq_attn": w_attn_t[:query_size].astype(matmul_dtype),   # [Dq, S]
        "wk_attn": w_attn_t[query_size:].astype(matmul_dtype),   # [Dk, S]
        "b_attn": jnp.asarray(params["b_attn"], jnp.float32).reshape(1, seq_len),
        "wc_comb": w_comb_t[query_size:].astype(matmul_dtype),   # [H, O] (wrapper folds V)
        "wq_aug": wq_aug.astype(matmul_dtype),                   # [Dq, O+S]
        "b_aug": b_aug,                                          # [1, O+S]
    }


@jax.jit
def attn_forward(Q, K, V, prep):
    """Q:[1,B,Dq] K:[1,B,Dk] V:[1,S,H] -> (output [1,B,O], attn_weights [B,S])."""
    q0, k0, v0 = Q[0], K[0], V[0]
    B, Dq = q0.shape
    _, Dk = k0.shape
    S, H = v0.shape
    OS = prep["b_aug"].shape[1]                 # O + S
    O = OS - S
    mm = prep["wq_attn"].dtype

    # Fold V into the combine weight once per call (tiny [S,H]@[H,O] matmul),
    # append I_S so the same MXU pass also emits the attention weights.
    m_fold = jnp.dot(v0.astype(mm), prep["wc_comb"],
                     preferred_element_type=jnp.float32)          # [S, O]
    m_aug = jnp.concatenate(
        [m_fold, jnp.eye(S, dtype=jnp.float32)], axis=1).astype(mm)  # [S, O+S]

    # Batch tiling: pad B up to a tile multiple (never collapse to one giant
    # unpipelined tile); >=2 grid steps at large B for v7x megacore sharding.
    tb = _pick_batch_tile(B)
    Bp = _round_up(B, tb)
    if Bp != B:
        q0 = jnp.pad(q0, ((0, Bp - B), (0, 0)))
        k0 = jnp.pad(k0, ((0, Bp - B), (0, 0)))
    grid = (Bp // tb,)

    batched = lambda shape: pl.BlockSpec(shape, lambda i: (i, 0))
    resident = lambda shape: pl.BlockSpec(shape, lambda i: (0, 0))

    fused = pl.pallas_call(
        _attn_kernel,
        out_shape=jax.ShapeDtypeStruct((Bp, OS), jnp.float32),
        grid=grid,
        in_specs=[batched((tb, Dq)), batched((tb, Dk)),
                  resident((Dq, S)), resident((Dk, S)), resident((1, S)),
                  resident((Dq, OS)), resident((S, OS)), resident((1, OS))],
        out_specs=batched((tb, OS)),
        compiler_params=pltpu.CompilerParams(
            dimension_semantics=("parallel",)),
    )(q0, k0, prep["wq_attn"], prep["wk_attn"], prep["b_attn"],
      prep["wq_aug"], m_aug, prep["b_aug"])

    output = fused[:B, :O][None]                # [1, B, O], like PyTorch unsqueeze(0)
    attn_weights = fused[:B, O:]                # [B, S]
    return output, attn_weights


def init_params(key, query_size, key_size, seq_len, hidden_size, output_size):
    """PyTorch-layout (nn.Linear) parameters."""
    k1, k2, k3, k4 = jax.random.split(key, 4)
    in1 = query_size + key_size
    in2 = query_size + hidden_size
    bound1 = 1.0 / jnp.sqrt(in1)
    bound2 = 1.0 / jnp.sqrt(in2)
    return {
        "w_attn": jax.random.uniform(k1, (seq_len, in1), jnp.float32, -bound1, bound1),
        "b_attn": jax.random.uniform(k2, (seq_len,), jnp.float32, -bound1, bound1),
        "w_comb": jax.random.uniform(k3, (output_size, in2), jnp.float32, -bound2, bound2),
        "b_comb": jax.random.uniform(k4, (output_size,), jnp.float32, -bound2, bound2),
    }


if __name__ == "__main__":
    # small shapes consistent with the module
    query_size, key_size = 32, 32
    seq_len, hidden_size = 8, 32       # value_size1, value_size2
    output_size = 32
    batch = 2

    root = jax.random.PRNGKey(0)
    kq, kk, kv, kp = jax.random.split(root, 4)

    Q = jax.random.normal(kq, (1, batch, query_size), jnp.float32)
    K = jax.random.normal(kk, (1, batch, key_size), jnp.float32)
    V = jax.random.normal(kv, (1, seq_len, hidden_size), jnp.float32)

    params = init_params(kp, query_size, key_size, seq_len, hidden_size, output_size)
    prep = prepare_params(params, query_size)   # one-time weight prep (hoisted)

    output, attn_weights = attn_forward(Q, K, V, prep)
    jax.block_until_ready((output, attn_weights))

    # pure-JAX f32 reference of the PyTorch forward
    logits_ref = (jnp.concatenate([Q[0], K[0]], axis=1) @ params["w_attn"].T
                  + params["b_attn"])
    w_ref = jax.nn.softmax(logits_ref, axis=-1)
    ctx_ref = (w_ref[None] @ V)[0]
    out_ref = (jnp.concatenate([Q[0], ctx_ref], axis=1) @ params["w_comb"].T
               + params["b_comb"])[None]

    assert output.shape == (1, batch, output_size)
    assert attn_weights.shape == (batch, seq_len)
    # bf16 matmul operands with f32 accumulation (and a bf16 identity pass for
    # attn_weights) -> compare against the f32 reference with loosened but
    # still tight tolerances.
    assert jnp.allclose(attn_weights, w_ref, atol=2e-2), "attn_weights mismatch"
    assert jnp.allclose(output, out_ref, atol=5e-2), "output mismatch"
    print("KERNEL_OK")
</pallas_src>

<mosaic_0001>
module attributes {stable_mosaic.version = 11 : i64} {
  func.func @_attn_kernel(%arg0: i32, %arg1: memref<16x32xf32, #tpu.memory_space<vmem>>, %arg2: memref<16x32xf32, #tpu.memory_space<vmem>>, %arg3: memref<32x8xbf16, #tpu.memory_space<vmem>>, %arg4: memref<32x8xbf16, #tpu.memory_space<vmem>>, %arg5: memref<1x8xf32, #tpu.memory_space<vmem>>, %arg6: memref<32x40xbf16, #tpu.memory_space<vmem>>, %arg7: memref<8x40xbf16, #tpu.memory_space<vmem>>, %arg8: memref<1x40xf32, #tpu.memory_space<vmem>>, %arg9: memref<16x40xf32, #tpu.memory_space<vmem>>) attributes {dimension_semantics = [#tpu.dimension_semantics<parallel>], iteration_bounds = array<i64: 1>, scalar_prefetch = 0 : i64, scratch_operands = 0 : i64, tpu.core_type = #tpu.core_type<tc>, window_params = [{transform_indices = @transform_0, window_bounds = array<i64: 16, 32>}, {transform_indices = @transform_1, window_bounds = array<i64: 16, 32>}, {pipeline_mode = #tpu.pipeline_mode<synchronous>, transform_indices = @transform_2, window_bounds = array<i64: 32, 8>}, {pipeline_mode = #tpu.pipeline_mode<synchronous>, transform_indices = @transform_3, window_bounds = array<i64: 32, 8>}, {pipeline_mode = #tpu.pipeline_mode<synchronous>, transform_indices = @transform_4, window_bounds = array<i64: 1, 8>}, {pipeline_mode = #tpu.pipeline_mode<synchronous>, transform_indices = @transform_5, window_bounds = array<i64: 32, 40>}, {pipeline_mode = #tpu.pipeline_mode<synchronous>, transform_indices = @transform_6, window_bounds = array<i64: 8, 40>}, {pipeline_mode = #tpu.pipeline_mode<synchronous>, transform_indices = @transform_7, window_bounds = array<i64: 1, 40>}, {transform_indices = @transform_8, window_bounds = array<i64: 16, 40>}]} {
    %c0 = arith.constant 0 : index
    %c0_0 = arith.constant 0 : index
    %0 = vector.load %arg1[%c0, %c0_0] : memref<16x32xf32, #tpu.memory_space<vmem>>, vector<16x32xf32>
    %1 = arith.truncf %0 : vector<16x32xf32> to vector<16x32xbf16>
    %c0_1 = arith.constant 0 : index
    %c0_2 = arith.constant 0 : index
    %2 = vector.load %arg2[%c0_1, %c0_2] : memref<16x32xf32, #tpu.memory_space<vmem>>, vector<16x32xf32>
    %3 = arith.truncf %2 : vector<16x32xf32> to vector<16x32xbf16>
    %c0_3 = arith.constant 0 : index
    %c0_4 = arith.constant 0 : index
    %4 = vector.load %arg3[%c0_3, %c0_4] : memref<32x8xbf16, #tpu.memory_space<vmem>>, vector<32x8xbf16>
    %cst = arith.constant dense<0.000000e+00> : vector<16x8xf32>
    %5 = tpu.matmul %1, %4, %cst {dimension_numbers = #tpu.dot_dimension_numbers<[1], [0], [0], [1], [0, 0, 1, 1], [], []>} : vector<16x32xbf16>, vector<32x8xbf16>, vector<16x8xf32> -> vector<16x8xf32>
    %c0_5 = arith.constant 0 : index
    %c0_6 = arith.constant 0 : index
    %6 = vector.load %arg4[%c0_5, %c0_6] : memref<32x8xbf16, #tpu.memory_space<vmem>>, vector<32x8xbf16>
    %cst_7 = arith.constant dense<0.000000e+00> : vector<16x8xf32>
    %7 = tpu.matmul %3, %6, %cst_7 {dimension_numbers = #tpu.dot_dimension_numbers<[1], [0], [0], [1], [0, 0, 1, 1], [], []>} : vector<16x32xbf16>, vector<32x8xbf16>, vector<16x8xf32> -> vector<16x8xf32>
    %8 = arith.addf %5, %7 : vector<16x8xf32>
    %c0_8 = arith.constant 0 : index
    %c0_9 = arith.constant 0 : index
    %9 = vector.load %arg5[%c0_8, %c0_9] : memref<1x8xf32, #tpu.memory_space<vmem>>, vector<1x8xf32>
    %10 = vector.broadcast %9 : vector<1x8xf32> to vector<16x8xf32>
    %11 = arith.addf %8, %10 : vector<16x8xf32>
    %cst_10 = arith.constant dense<0xFF800000> : vector<16xf32>
    %12 = vector.multi_reduction <maximumf>, %11, %cst_10 [1] : vector<16x8xf32> to vector<16xf32>
    %13 = vector.shape_cast %12 : vector<16xf32> to vector<16x1xf32>
    %14 = vector.broadcast %13 : vector<16x1xf32> to vector<16x8xf32>
    %15 = arith.subf %11, %14 : vector<16x8xf32>
    %16 = math.exp %15 : vector<16x8xf32>
    %cst_11 = arith.constant dense<0.000000e+00> : vector<16xf32>
    %17 = vector.multi_reduction <add>, %16, %cst_11 [1] : vector<16x8xf32> to vector<16xf32>
    %18 = vector.shape_cast %17 : vector<16xf32> to vector<16x1xf32>
    %19 = tpu.reciprocal %18 {approx = true} : vector<16x1xf32> -> vector<16x1xf32>
    %20 = vector.broadcast %19 : vector<16x1xf32> to vector<16x8xf32>
    %21 = arith.mulf %16, %20 : vector<16x8xf32>
    %c0_12 = arith.constant 0 : index
    %c0_13 = arith.constant 0 : index
    %22 = vector.load %arg6[%c0_12, %c0_13] : memref<32x40xbf16, #tpu.memory_space<vmem>>, vector<32x40xbf16>
    %cst_14 = arith.constant dense<0.000000e+00> : vector<16x40xf32>
    %23 = tpu.matmul %1, %22, %cst_14 {dimension_numbers = #tpu.dot_dimension_numbers<[1], [0], [0], [1], [0, 0, 1, 1], [], []>} : vector<16x32xbf16>, vector<32x40xbf16>, vector<16x40xf32> -> vector<16x40xf32>
    %24 = arith.truncf %21 : vector<16x8xf32> to vector<16x8xbf16>
    %c0_15 = arith.constant 0 : index
    %c0_16 = arith.constant 0 : index
    %25 = vector.load %arg7[%c0_15, %c0_16] : memref<8x40xbf16, #tpu.memory_space<vmem>>, vector<8x40xbf16>
    %cst_17 = arith.constant dense<0.000000e+00> : vector<16x40xf32>
    %26 = tpu.matmul %24, %25, %cst_17 {dimension_numbers = #tpu.dot_dimension_numbers<[1], [0], [0], [1], [0, 0, 1, 1], [], []>} : vector<16x8xbf16>, vector<8x40xbf16>, vector<16x40xf32> -> vector<16x40xf32>
    %27 = arith.addf %23, %26 : vector<16x40xf32>
    %c0_18 = arith.constant 0 : index
    %c0_19 = arith.constant 0 : index
    %28 = vector.load %arg8[%c0_18, %c0_19] : memref<1x40xf32, #tpu.memory_space<vmem>>, vector<1x40xf32>
    %29 = vector.broadcast %28 : vector<1x40xf32> to vector<16x40xf32>
    %30 = arith.addf %27, %29 : vector<16x40xf32>
    %c0_20 = arith.constant 0 : index
    %c0_21 = arith.constant 0 : index
    %31 = vector.load %arg9[%c0_20, %c0_21] : memref<16x40xf32, #tpu.memory_space<vmem>>, vector<16x40xf32>
    tpu.vector_store %arg9[%c0_20, %c0_21], %30 {strides = array<i32>} : memref<16x40xf32, #tpu.memory_space<vmem>>, vector<16x40xf32>,
    return
  }
  func.func @transform_0(%arg0: i32) -> (i32, i32) {
    %c0_i32 = arith.constant 0 : i32
    %c0_i32_0 = arith.constant 0 : i32
    return %arg0, %c0_i32 : i32, i32
  }
  func.func @transform_1(%arg0: i32) -> (i32, i32) {
    %c0_i32 = arith.constant 0 : i32
    %c0_i32_0 = arith.constant 0 : i32
    return %arg0, %c0_i32 : i32, i32
  }
  func.func @transform_2(%arg0: i32) -> (i32, i32) {
    %c0_i32 = arith.constant 0 : i32
    %c0_i32_0 = arith.constant 0 : i32
    %c0_i32_1 = arith.constant 0 : i32
    return %c0_i32, %c0_i32_0 : i32, i32
  }
  func.func @transform_3(%arg0: i32) -> (i32, i32) {
    %c0_i32 = arith.constant 0 : i32
    %c0_i32_0 = arith.constant 0 : i32
    %c0_i32_1 = arith.constant 0 : i32
    return %c0_i32, %c0_i32_0 : i32, i32
  }
  func.func @transform_4(%arg0: i32) -> (i32, i32) {
    %c0_i32 = arith.constant 0 : i32
    %c0_i32_0 = arith.constant 0 : i32
    %c0_i32_1 = arith.constant 0 : i32
    return %c0_i32, %c0_i32_0 : i32, i32
  }
  func.func @transform_5(%arg0: i32) -> (i32, i32) {
    %c0_i32 = arith.constant 0 : i32
    %c0_i32_0 = arith.constant 0 : i32
    %c0_i32_1 = arith.constant 0 : i32
    return %c0_i32, %c0_i32_0 : i32, i32
  }
  func.func @transform_6(%arg0: i32) -> (i32, i32) {
    %c0_i32 = arith.constant 0 : i32
    %c0_i32_0 = arith.constant 0 : i32
    %c0_i32_1 = arith.constant 0 : i32
    return %c0_i32, %c0_i32_0 : i32, i32
  }
  func.func @transform_7(%arg0: i32) -> (i32, i32) {
    %c0_i32 = arith.constant 0 : i32
    %c0_i32_0 = arith.constant 0 : i32
    %c0_i32_1 = arith.constant 0 : i32
    return %c0_i32, %c0_i32_0 : i32, i32
  }
  func.func @transform_8(%arg0: i32) -> (i32, i32) {
    %c0_i32 = arith.constant 0 : i32
    %c0_i32_0 = arith.constant 0 : i32
    return %arg0, %c0_i32 : i32, i32
  }
}

</mosaic_0001>

<llo_original>
// kernel: attn_forward.1
$region0: #{attn_forward.1}
  #allocation0 [shape = 'u32[]', space=smem, size = 0x4, offset = 0x4, fixed_abs, tag = 'smem constant byte address 0x4 - core index']
  #allocation1 [shape = 'u32[144,128]{1,0:T(1,128)}', space=vmem, size = 0x12000, scoped, tag = 'internal scratch']
  %s0 = inlined_call_operand.vmem [shape: f32[16,32], index: 0, kind: input, shape index: {}]
  %s1 = inlined_call_operand.vmem [shape: f32[16,32], index: 1, kind: input, shape index: {}]
  %s2 = inlined_call_operand.vmem [shape: bf16[32,8], index: 2, kind: input, shape index: {}]
  %s3 = inlined_call_operand.vmem [shape: bf16[32,8], index: 3, kind: input, shape index: {}]
  %s4 = inlined_call_operand.vmem [shape: f32[1,8], index: 4, kind: input, shape index: {}]
  %s5 = inlined_call_operand.vmem [shape: bf16[32,40], index: 5, kind: input, shape index: {}]
  %s6 = inlined_call_operand.vmem [shape: bf16[8,40], index: 6, kind: input, shape index: {}]
  %s7 = inlined_call_operand.vmem [shape: f32[1,40], index: 7, kind: input, shape index: {}]
  %s8 = inlined_call_operand.vmem [shape: f32[16,40], index: 8, kind: output, shape index: {}]
  %s9 = sld [smem:[#allocation0]]
  $region42: #{attn_forward.1} parent=0
    _
  %s11 = ssub.s32 1, %s9
  %s12 = scalar_select 0, %s11, %s9
  // Predicated region
  $region2: #{attn_forward.1} parent=0 // pred_check
    _
  $region3: #{attn_forward.1} parent=0 // pred_check_branch
    %14 = sbr.rel (0) target = $region5
  $region4: #{attn_forward.1} parent=0 // pred_region
    _
  $region5: #{attn_forward.1} parent=0 // pred_fallthru
    _
  // Predicated region
  $region6: #{attn_forward.1} parent=0 // pred_check
    _
  $region7: #{attn_forward.1} parent=0 // pred_check_branch
    %16 = sbr.rel (0) target = $region9
  $region8: #{attn_forward.1} parent=0 // pred_region
    _
  $region9: #{attn_forward.1} parent=0 // pred_fallthru
    _
  // Predicated region
  $region10: #{attn_forward.1} parent=0 // pred_check
    _
  $region11: #{attn_forward.1} parent=0 // pred_check_branch
    %18 = sbr.rel (0) target = $region13
  $region12: #{attn_forward.1} parent=0 // pred_region
    _
  $region13: #{attn_forward.1} parent=0 // pred_fallthru
    _
  // Predicated region
  $region14: #{attn_forward.1} parent=0 // pred_check
    _
  $region15: #{attn_forward.1} parent=0 // pred_check_branch
    %20 = sbr.rel (0) target = $region17
  $region16: #{attn_forward.1} parent=0 // pred_region
    _
  $region17: #{attn_forward.1} parent=0 // pred_fallthru
    _
  // Predicated region
  $region18: #{attn_forward.1} parent=0 // pred_check
    _
  $region19: #{attn_forward.1} parent=0 // pred_check_branch
    %22 = sbr.rel (0) target = $region21
  $region20: #{attn_forward.1} parent=0 // pred_region
    _
  $region21: #{attn_forward.1} parent=0 // pred_fallthru
    _
  // Predicated region
  $region22: #{attn_forward.1} parent=0 // pred_check
    _
  $region23: #{attn_forward.1} parent=0 // pred_check_branch
    %24 = sbr.rel (0) target = $region25
  $region24: #{attn_forward.1} parent=0 // pred_region
    _
  $region25: #{attn_forward.1} parent=0 // pred_fallthru
    _
  // Predicated region
  $region26: #{attn_forward.1} parent=0 // pred_check
    _
  $region27: #{attn_forward.1} parent=0 // pred_check_branch
    %26 = sbr.rel (0) target = $region29
  $region28: #{attn_forward.1} parent=0 // pred_region
    _
  $region29: #{attn_forward.1} parent=0 // pred_fallthru
    _
  // Predicated region
  $region30: #{attn_forward.1} parent=0 // pred_check
    _
  $region31: #{attn_forward.1} parent=0 // pred_check_branch
    %28 = sbr.rel (0) target = $region33
  $region32: #{attn_forward.1} parent=0 // pred_region
    _
  $region33: #{attn_forward.1} parent=0 // pred_fallthru
    _
  %v30 = vld [vmem:[%s0] sm:$0xff]
  %v31 = vld [vmem:[%s0 + $0x8] sm:$0xff]
  %v32 = vpack.c.bf16 %v31, %v30
  %v33 = vld [vmem:[%s1] sm:$0xff]
  %v34 = vld [vmem:[%s1 + $0x8] sm:$0xff]
  %v35 = vpack.c.bf16 %v34, %v33
  %v36 = vld [vmem:[%s2] sm:$0xf]
  %v37 = vld [vmem:[%s2 + $0x4] sm:$0xf]
  %v38 = vld [vmem:[%s2 + $0x8] sm:$0xf]
  %v39 = vld [vmem:[%s2 + $0xc] sm:$0xf]
  %v40 = vld [vmem:[%s3] sm:$0xf]
  %v41 = vld [vmem:[%s3 + $0x4] sm:$0xf]
  %v42 = vld [vmem:[%s3 + $0x8] sm:$0xf]
  %v43 = vld [vmem:[%s3 + $0xc] sm:$0xf]
  %v48 = vunpack.c.l.b16 %v40
  %v49 = vunpack.c.l.b16 %v41
  %v50 = vunpack.c.l.b16 %v42
  %v51 = vunpack.c.l.b16 %v43
  %v52 = vpack.c.b16 %v49, %v48
  %v53 = vpack.c.b16 %v51, %v50
  %vm56 = vcmask 261120
  %v58 = vsel %vm56, %v35, 0
  %60 = vmatprep.subr.bf16.mxu0 0
  %61 = vmatpush1.bf16.msra.mxu0 %v52
  %62 = vmatprep.subr.bf16.mxu0 0
  %63 = vmatpush1.bf16.msra.mxu0 %v53
  %64 = vmatprep.subr.bf16.mxu0 0
  %65 = vmatpush1.bf16.msra.mxu0 0
  %66 = vmatprep.subr.bf16.mxu0 0
  %67 = vmatpush1.bf16.msra.mxu0 0
  %68 = vmatprep.subr.bf16.mxu0 0
  %69 = vmatpush1.bf16.msra.mxu0 0
  %70 = vmatprep.subr.bf16.mxu0 0
  %71 = vmatpush1.bf16.msra.mxu0 0
  %72 = vmatprep.subr.bf16.mxu0 0
  %73 = vmatpush1.bf16.msra.mxu0 0
  %74 = vmatprep.subr.bf16.mxu0 0
  %75 = vmatpush1.bf16.msra.mxu0 0
  %76 = vmatprep.subr.bf16.mxu0 0
  %77 = vmatpush1.bf16.msra.mxu0 0
  %78 = vmatprep.subr.bf16.mxu0 0
  %79 = vmatpush1.bf16.msra.mxu0 0
  %80 = vmatprep.subr.bf16.mxu0 0
  %81 = vmatpush1.bf16.msra.mxu0 0
  %82 = vmatprep.subr.bf16.mxu0 0
  %83 = vmatpush1.bf16.msra.mxu0 0
  %84 = vmatprep.subr.bf16.mxu0 0
  %85 = vmatpush1.bf16.msra.mxu0 0
  %86 = vmatprep.subr.bf16.mxu0 0
  %87 = vmatpush1.bf16.msra.mxu0 0
  %88 = vmatprep.subr.bf16.mxu0 0
  %89 = vmatpush1.bf16.msra.mxu0 0
  %90 = vmatprep.subr.bf16.mxu0 0
  %91 = vmatpush1.bf16.msra.mxu0 0
  %92 = vmatprep.mubr.bf16.mxu0 0
  %93 = vmatmul.mubr.bf16.gmra.mrb[0].mxu0 %v58
  %v94 = vpop.f32.mrb[0].mxu0
  %v95 = vadd.f32 0.0, %v94
  %v96 = vpop.f32.mrb[0].mxu0
  %v97 = vpop.f32.mrb[0].mxu0
  %v98 = vadd.f32 0.0, %v97
  %v99 = vpop.f32.mrb[0].mxu0
  %100 = vdwg.mxu0
  %v105 = vunpack.c.l.b16 %v36
  %v106 = vunpack.c.l.b16 %v37
  %v107 = vunpack.c.l.b16 %v38
  %v108 = vunpack.c.l.b16 %v39
  %v109 = vpack.c.b16 %v106, %v105
  %v110 = vpack.c.b16 %v108, %v107
  %v114 = vsel %vm56, %v32, 0
  %116 = vmatprep.subr.bf16.mxu0 0
  %117 = vmatpush1.bf16.msra.mxu0 %v109
  %118 = vmatprep.subr.bf16.mxu0 0
  %119 = vmatpush1.bf16.msra.mxu0 %v110
  %120 = vmatprep.subr.bf16.mxu0 0
  %121 = vmatpush1.bf16.msra.mxu0 0
  %122 = vmatprep.subr.bf16.mxu0 0
  %123 = vmatpush1.bf16.msra.mxu0 0
  %124 = vmatprep.subr.bf16.mxu0 0
  %125 = vmatpush1.bf16.msra.mxu0 0
  %126 = vmatprep.subr.bf16.mxu0 0
  %127 = vmatpush1.bf16.msra.mxu0 0
  %128 = vmatprep.subr.bf16.mxu0 0
  %129 = vmatpush1.bf16.msra.mxu0 0
  %130 = vmatprep.subr.bf16.mxu0 0
  %131 = vmatpush1.bf16.msra.mxu0 0
  %132 = vmatprep.subr.bf16.mxu0 0
  %133 = vmatpush1.bf16.msra.mxu0 0
  %134 = vmatprep.subr.bf16.mxu0 0
  %135 = vmatpush1.bf16.msra.mxu0 0
  %136 = vmatprep.subr.bf16.mxu0 0
  %137 = vmatpush1.bf16.msra.mxu0 0
  %138 = vmatprep.subr.bf16.mxu0 0
  %139 = vmatpush1.bf16.msra.mxu0 0
  %140 = vmatprep.subr.bf16.mxu0 0
  %141 = vmatpush1.bf16.msra.mxu0 0
  %142 = vmatprep.subr.bf16.mxu0 0
  %143 = vmatpush1.bf16.msra.mxu0 0
  %144 = vmatprep.subr.bf16.mxu0 0
  %145 = vmatpush1.bf16.msra.mxu0 0
  %146 = vmatprep.subr.bf16.mxu0 0
  %147 = vmatpush1.bf16.msra.mxu0 0
  %148 = vmatprep.mubr.bf16.mxu0 0
  %149 = vmatmul.mubr.bf16.gmra.mrb[0].mxu0 %v114
  %v150 = vpop.f32.mrb[0].mxu0
  %v151 = vadd.f32 %v95, %v150
  %v152 = vpop.f32.mrb[0].mxu0
  %v153 = vpop.f32.mrb[0].mxu0
  %v154 = vadd.f32 %v98, %v153
  %v155 = vpop.f32.mrb[0].mxu0
  %156 = vdwg.mxu0
  %v157 = vld [vmem:[%s4] sm:$0x1]
  %v159 = vlaneseq
  %v160 = vshrl.u32 %v159, 7
  %v161 = vsub.s32 0, %v160
  %v162 = vrot.slane %v157, %v161
  %v164 = vadd.f32 %v151, %v162
  %v165 = vadd.f32 %v154, %v162
  %vm166 = vcmask 64512
  %v167 = vsel %vm166, %v164, -inf
  %168 = vmax.xlane.f32.xlu0 %v167
  %v169 = vpop.xlane.xlu0 %168
  %v170 = vsel %vm166, %v165, -inf
  %171 = vmax.xlane.f32.xlu0 %v170
  %v172 = vpop.xlane.xlu0 %171
  %v173 = vsub.f32 %v164, %v169
  %v174 = vsub.f32 %v165, %v172
  %v175 = vmul.f32 %v173, 1.442695
  %v176 = vpow.pop %v175
  %v177 = vmul.f32 %v174, 1.442695
  %v178 = vpow.pop %v177
  %v179 = vsel %vm166, %v176, 0.0
  %180 = vadd.xlane.f32.xlu0 %v179
  %v181 = vpop.xlane.xlu0 %180
  %v182 = vsel %vm166, %v178, 0.0
  %183 = vadd.xlane.f32.xlu0 %v182
  %v184 = vpop.xlane.xlu0 %183
  %v185 = vrcp.pop %v181
  %v186 = vrcp.pop %v184
  %v187 = vmul.f32 %v176, %v185
  %v188 = vmul.f32 %v178, %v186
  %v189 = vld [vmem:[%s5] sm:$0xf]
  %v190 = vld [vmem:[%s5 + $0x4] sm:$0xf]
  %v191 = vld [vmem:[%s5 + $0x8] sm:$0xf]
  %v192 = vld [vmem:[%s5 + $0xc] sm:$0xf]
  %v193 = vpack.c.bf16 %v188, %v187
  %v194 = vld [vmem:[%s6] sm:$0xf]
  %v196 = vsel %vm166, %v193, 0
  %vm198 = vcmask 1043456
  %v200 = vsel %vm198, %v194, 0
  %202 = vmatprep.subr.bf16.mxu0 0
  %203 = vmatpush1.bf16.msra.mxu0 %v200
  %204 = vmatprep.subr.bf16.mxu0 0
  %205 = vmatpush1.bf16.msra.mxu0 0
  %206 = vmatprep.subr.bf16.mxu0 0
  %207 = vmatpush1.bf16.msra.mxu0 0
  %208 = vmatprep.subr.bf16.mxu0 0
  %209 = vmatpush1.bf16.msra.mxu0 0
  %210 = vmatprep.subr.bf16.mxu0 0
  %211 = vmatpush1.bf16.msra.mxu0 0
  %212 = vmatprep.subr.bf16.mxu0 0
  %213 = vmatpush1.bf16.msra.mxu0 0
  %214 = vmatprep.subr.bf16.mxu0 0
  %215 = vmatpush1.bf16.msra.mxu0 0
  %216 = vmatprep.subr.bf16.mxu0 0
  %217 = vmatpush1.bf16.msra.mxu0 0
  %218 = vmatprep.subr.bf16.mxu0 0
  %219 = vmatpush1.bf16.msra.mxu0 0
  %220 = vmatprep.subr.bf16.mxu0 0
  %221 = vmatpush1.bf16.msra.mxu0 0
  %222 = vmatprep.subr.bf16.mxu0 0
  %223 = vmatpush1.bf16.msra.mxu0 0
  %224 = vmatprep.subr.bf16.mxu0 0
  %225 = vmatpush1.bf16.msra.mxu0 0
  %226 = vmatprep.subr.bf16.mxu0 0
  %227 = vmatpush1.bf16.msra.mxu0 0
  %228 = vmatprep.subr.bf16.mxu0 0
  %229 = vmatpush1.bf16.msra.mxu0 0
  %230 = vmatprep.subr.bf16.mxu0 0
  %231 = vmatpush1.bf16.msra.mxu0 0
  %232 = vmatprep.subr.bf16.mxu0 0
  %233 = vmatpush1.bf16.msra.mxu0 0
  %234 = vmatprep.mubr.bf16.mxu0 0
  %235 = vmatmul.mubr.bf16.gmra.mrb[0].mxu0 %v196
  %v236 = vpop.f32.mrb[0].mxu0
  %v237 = vadd.f32 0.0, %v236
  %v238 = vpop.f32.mrb[0].mxu0
  %v239 = vpop.f32.mrb[0].mxu0
  %v240 = vadd.f32 0.0, %v239
  %v241 = vpop.f32.mrb[0].mxu0
  %242 = vdwg.mxu0
  %v247 = vunpack.c.l.b16 %v189
  %v248 = vunpack.c.l.b16 %v190
  %v249 = vunpack.c.l.b16 %v191
  %v250 = vunpack.c.l.b16 %v192
  %v251 = vpack.c.b16 %v248, %v247
  %v252 = vpack.c.b16 %v250, %v249
  %255 = vmatprep.subr.bf16.mxu0 0
  %256 = vmatpush1.bf16.msra.mxu0 %v251
  %257 = vmatprep.subr.bf16.mxu0 0
  %258 = vmatpush1.bf16.msra.mxu0 %v252
  %259 = vmatprep.subr.bf16.mxu0 0
  %260 = vmatpush1.bf16.msra.mxu0 0
  %261 = vmatprep.subr.bf16.mxu0 0
  %262 = vmatpush1.bf16.msra.mxu0 0
  %263 = vmatprep.subr.bf16.mxu0 0
  %264 = vmatpush1.bf16.msra.mxu0 0
  %265 = vmatprep.subr.bf16.mxu0 0
  %266 = vmatpush1.bf16.msra.mxu0 0
  %267 = vmatprep.subr.bf16.mxu0 0
  %268 = vmatpush1.bf16.msra.mxu0 0
  %269 = vmatprep.subr.bf16.mxu0 0
  %270 = vmatpush1.bf16.msra.mxu0 0
  %271 = vmatprep.subr.bf16.mxu0 0
  %272 = vmatpush1.bf16.msra.mxu0 0
  %273 = vmatprep.subr.bf16.mxu0 0
  %274 = vmatpush1.bf16.msra.mxu0 0
  %275 = vmatprep.subr.bf16.mxu0 0
  %276 = vmatpush1.bf16.msra.mxu0 0
  %277 = vmatprep.subr.bf16.mxu0 0
  %278 = vmatpush1.bf16.msra.mxu0 0
  %279 = vmatprep.subr.bf16.mxu0 0
  %280 = vmatpush1.bf16.msra.mxu0 0
  %281 = vmatprep.subr.bf16.mxu0 0
  %282 = vmatpush1.bf16.msra.mxu0 0
  %283 = vmatprep.subr.bf16.mxu0 0
  %284 = vmatpush1.bf16.msra.mxu0 0
  %285 = vmatprep.subr.bf16.mxu0 0
  %286 = vmatpush1.bf16.msra.mxu0 0
  %287 = vmatprep.mubr.bf16.mxu0 0
  %288 = vmatmul.mubr.bf16.gmra.mrb[0].mxu0 %v114
  %v289 = vpop.f32.mrb[0].mxu0
  %v290 = vadd.f32 %v237, %v289
  %v291 = vpop.f32.mrb[0].mxu0
  %v292 = vpop.f32.mrb[0].mxu0
  %v293 = vadd.f32 %v240, %v292
  %v294 = vpop.f32.mrb[0].mxu0
  %295 = vdwg.mxu0
  %v296 = vld [vmem:[%s7] sm:$0x1]
  %v298 = vlaneseq
  %v299 = vshrl.u32 %v298, 7
  %v300 = vsub.s32 0, %v299
  %v301 = vrot.slane %v296, %v300
  %v303 = vadd.f32 %v290, %v301
  %v304 = vadd.f32 %v293, %v301
  %vm305 = vcmask 326656
  %306 = vst.msk [vmem:[%s8] sm:$0xff] %vm305, %v303
  %307 = vst.msk [vmem:[%s8 + $0x8] sm:$0xff] %vm305, %v304
  // Predicated region
  $region34: #{attn_forward.1} parent=0 // pred_check
    _
  $region35: #{attn_forward.1} parent=0 // pred_check_branch
    %309 = sbr.rel (0) target = $region37
  $region36: #{attn_forward.1} parent=0 // pred_region
    _
  $region37: #{attn_forward.1} parent=0 // pred_fallthru
    _
  // Predicated region
  $region38: #{attn_forward.1} parent=0 // pred_check
    _
  $region39: #{attn_forward.1} parent=0 // pred_check_branch
    %311 = sbr.rel (0) target = $region41
  $region40: #{attn_forward.1} parent=0 // pred_region
    _
  $region41: #{attn_forward.1} parent=0 // pred_fallthru
    _

</llo_original>
